<compile_context>
chip_gen: v5e
topology: v5e:2x2
jax: 0.10.0
libtpu: 0.0.40
codegen_flags: <defaults>
</compile_context>

<pallas_src>
import jax
import jax.numpy as jnp
from jax import lax
from jax.experimental import pallas as pl
from jax.experimental.pallas import tpu as pltpu

HIDDEN = 128  # lane-dense hidden width (layers 2/3 zero-padded up to this)


def mlp_kernel(x_ref, w1_ref, b1_ref, w2_ref, b2_ref, w3_ref, b3_ref,
               w4t_ref, b4_ref, o_ref):
    # Layer 1: (TB, D) @ (D, 128) -> bias -> ReLU.  bf16 MXU operands, f32 accum.
    h = jnp.dot(x_ref[...].astype(jnp.bfloat16), w1_ref[...],
                preferred_element_type=jnp.float32)
    h = jnp.maximum(h + b1_ref[...], 0.0)
    # Dropout(0.2) -> identity at inference.

    # Layer 2 (64 zero-padded to 128 lanes): (TB, 128) @ (128, 128).
    h = jnp.dot(h.astype(jnp.bfloat16), w2_ref[...],
                preferred_element_type=jnp.float32)
    h = jnp.maximum(h + b2_ref[...], 0.0)
    # Dropout(0.2) -> identity at inference.

    # Layer 3 (32 zero-padded to 128 lanes): (TB, 128) @ (128, 128).
    h = jnp.dot(h.astype(jnp.bfloat16), w3_ref[...],
                preferred_element_type=jnp.float32)
    h = jnp.maximum(h + b3_ref[...], 0.0)

    # Layer 4 (N=1): contract the padded hidden axis of h against w4t (1, 128),
    # producing a lane-dense (1, TB) row directly (padded lanes of h are 0).
    row = lax.dot_general(
        w4t_ref[...], h.astype(jnp.bfloat16),
        dimension_numbers=(((1,), (1,)), ((), ())),
        preferred_element_type=jnp.float32)                      # (1, TB)
    o_ref[...] = (row + b4_ref[...]).astype(o_ref.dtype)


def _round_up(n, m):
    return ((n + m - 1) // m) * m


def _choose_tile(batch, tb):
    """Batch tile: lane-aligned (mult. of 128) when the grid has >1 step."""
    tb = max(128, _round_up(tb, 128))
    if batch > tb:
        return tb
    if batch >= 256:
        # >=2 grid steps so v7x's two TensorCores both get work (no-op v5e/v6e).
        return _round_up(pl.cdiv(batch, 2), 128)
    return _round_up(batch, 8)


def ride_prediction_forward(x, params, tb=2048):
    (w1, b1), (w2, b2), (w3, b3), (w4, b4) = params
    B, D = x.shape
    H = HIDDEN

    # Zero-pad hidden widths to 128 lanes; exact through ReLU (padded cols stay 0).
    w2p = jnp.pad(w2, ((0, 0), (0, H - w2.shape[1])))
    b2p = jnp.pad(b2, ((0, 0), (0, H - b2.shape[1])))
    w3p = jnp.pad(w3, ((0, H - w3.shape[0]), (0, H - w3.shape[1])))
    b3p = jnp.pad(b3, ((0, 0), (0, H - b3.shape[1])))
    w4t = jnp.pad(w4.T, ((0, 0), (0, H - w4.shape[0])))          # (1, 128)

    # bf16 MXU operands; f32 accumulation happens in-kernel.
    w1b = w1.astype(jnp.bfloat16)
    w2b = w2p.astype(jnp.bfloat16)
    w3b = w3p.astype(jnp.bfloat16)
    w4tb = w4t.astype(jnp.bfloat16)

    TB = _choose_tile(B, tb)
    G = pl.cdiv(B, TB)   # last x block may be partial; no jnp.pad copy of x

    def const_spec(arr):
        # Weights/biases: one full block, DMA'd once, resident across grid steps.
        return pl.BlockSpec(arr.shape, lambda i: (0, 0))

    out_row = pl.pallas_call(
        mlp_kernel,
        out_shape=jax.ShapeDtypeStruct((1, G * TB), jnp.float32),  # lane-dense
        grid=(G,),
        in_specs=[
            pl.BlockSpec((TB, D), lambda i: (i, 0)),   # x: streamed over batch
            const_spec(w1b), const_spec(b1),
            const_spec(w2b), const_spec(b2p),
            const_spec(w3b), const_spec(b3p),
            const_spec(w4tb), const_spec(b4),
        ],
        out_specs=pl.BlockSpec((1, TB), lambda i: (0, i)),
        compiler_params=pltpu.CompilerParams(
            dimension_semantics=("parallel",),   # shard batch across TCs on v7x
        ),
    )(x, w1b, b1, w2b, b2p, w3b, b3p, w4tb, b4)

    return out_row.reshape(-1)[:B, None]


def init_params(key, input_size):
    """Deterministic init matching the nn.Linear shapes of the module."""
    sizes = [(input_size, 128), (128, 64), (64, 32), (32, 1)]
    params = []
    for i, (fan_in, fan_out) in enumerate(sizes):
        kw, kb = jax.random.split(jax.random.fold_in(key, i))
        bound = 1.0 / jnp.sqrt(fan_in)
        w = jax.random.uniform(kw, (fan_in, fan_out), jnp.float32, -bound, bound)
        b = jax.random.uniform(kb, (1, fan_out), jnp.float32, -bound, bound)
        params.append((w, b))
    return params


def reference_forward(x, params):
    """Pure-JAX reference matching the kernel's numerics (bf16 MXU, f32 accum)."""
    (w1, b1), (w2, b2), (w3, b3), (w4, b4) = params

    def bdot(a, w):
        return jnp.dot(a.astype(jnp.bfloat16), w.astype(jnp.bfloat16),
                       preferred_element_type=jnp.float32)

    h = jnp.maximum(bdot(x, w1) + b1, 0.0)
    h = jnp.maximum(bdot(h, w2) + b2, 0.0)
    h = jnp.maximum(bdot(h, w3) + b3, 0.0)
    return bdot(h, w4) + b4


if __name__ == "__main__":
    key = jax.random.PRNGKey(0)
    input_size = 32
    params = init_params(key, input_size)

    # Primary small test: single grid step.
    batch = 8
    x = jax.random.normal(jax.random.fold_in(key, 100), (batch, input_size),
                          dtype=jnp.float32)
    out = jax.block_until_ready(ride_prediction_forward(x, params))
    ref = reference_forward(x, params)
    assert out.shape == (batch, 1)
    assert jnp.allclose(out, ref, atol=5e-3, rtol=5e-3)

    # Secondary: ragged batch, >=2 grid steps, partial final x block,
    # lane-dense multi-block output.
    batch2 = 300
    x2 = jax.random.normal(jax.random.fold_in(key, 200), (batch2, input_size),
                           dtype=jnp.float32)
    out2 = jax.block_until_ready(ride_prediction_forward(x2, params))          # TB=256, G=2
    out3 = jax.block_until_ready(ride_prediction_forward(x2, params, tb=128))  # TB=128, G=3
    ref2 = reference_forward(x2, params)
    assert out2.shape == (batch2, 1) and out3.shape == (batch2, 1)
    assert jnp.allclose(out2, ref2, atol=5e-3, rtol=5e-3)
    assert jnp.allclose(out3, ref2, atol=5e-3, rtol=5e-3)

    print("KERNEL_OK")
</pallas_src>

<mosaic_0001>
module attributes {stable_mosaic.version = 11 : i64} {
  func.func @mlp_kernel(%arg0: i32, %arg1: memref<8x32xf32, #tpu.memory_space<vmem>>, %arg2: memref<32x128xbf16, #tpu.memory_space<vmem>>, %arg3: memref<1x128xf32, #tpu.memory_space<vmem>>, %arg4: memref<128x128xbf16, #tpu.memory_space<vmem>>, %arg5: memref<1x128xf32, #tpu.memory_space<vmem>>, %arg6: memref<128x128xbf16, #tpu.memory_space<vmem>>, %arg7: memref<1x128xf32, #tpu.memory_space<vmem>>, %arg8: memref<1x128xbf16, #tpu.memory_space<vmem>>, %arg9: memref<1x1xf32, #tpu.memory_space<vmem>>, %arg10: memref<1x8xf32, #tpu.memory_space<vmem>>) attributes {dimension_semantics = [#tpu.dimension_semantics<parallel>], iteration_bounds = array<i64: 1>, scalar_prefetch = 0 : i64, scratch_operands = 0 : i64, tpu.core_type = #tpu.core_type<tc>, window_params = [{transform_indices = @transform_0, window_bounds = array<i64: 8, 32>}, {pipeline_mode = #tpu.pipeline_mode<synchronous>, transform_indices = @transform_1, window_bounds = array<i64: 32, 128>}, {pipeline_mode = #tpu.pipeline_mode<synchronous>, transform_indices = @transform_2, window_bounds = array<i64: 1, 128>}, {pipeline_mode = #tpu.pipeline_mode<synchronous>, transform_indices = @transform_3, window_bounds = array<i64: 128, 128>}, {pipeline_mode = #tpu.pipeline_mode<synchronous>, transform_indices = @transform_4, window_bounds = array<i64: 1, 128>}, {pipeline_mode = #tpu.pipeline_mode<synchronous>, transform_indices = @transform_5, window_bounds = array<i64: 128, 128>}, {pipeline_mode = #tpu.pipeline_mode<synchronous>, transform_indices = @transform_6, window_bounds = array<i64: 1, 128>}, {pipeline_mode = #tpu.pipeline_mode<synchronous>, transform_indices = @transform_7, window_bounds = array<i64: 1, 128>}, {pipeline_mode = #tpu.pipeline_mode<synchronous>, transform_indices = @transform_8, window_bounds = array<i64: 1, 1>}, {transform_indices = @transform_9, window_bounds = array<i64: 1, 8>}]} {
    %c0 = arith.constant 0 : index
    %c0_0 = arith.constant 0 : index
    %0 = vector.load %arg1[%c0, %c0_0] : memref<8x32xf32, #tpu.memory_space<vmem>>, vector<8x32xf32>
    %1 = arith.truncf %0 : vector<8x32xf32> to vector<8x32xbf16>
    %c0_1 = arith.constant 0 : index
    %c0_2 = arith.constant 0 : index
    %2 = vector.load %arg2[%c0_1, %c0_2] : memref<32x128xbf16, #tpu.memory_space<vmem>>, vector<32x128xbf16>
    %cst = arith.constant dense<0.000000e+00> : vector<8x128xf32>
    %3 = tpu.matmul %1, %2, %cst {dimension_numbers = #tpu.dot_dimension_numbers<[1], [0], [0], [1], [0, 0, 1, 1], [], []>} : vector<8x32xbf16>, vector<32x128xbf16>, vector<8x128xf32> -> vector<8x128xf32>
    %c0_3 = arith.constant 0 : index
    %c0_4 = arith.constant 0 : index
    %4 = vector.load %arg3[%c0_3, %c0_4] : memref<1x128xf32, #tpu.memory_space<vmem>>, vector<1x128xf32>
    %5 = vector.broadcast %4 : vector<1x128xf32> to vector<8x128xf32>
    %6 = arith.addf %3, %5 : vector<8x128xf32>
    %cst_5 = arith.constant 0.000000e+00 : f32
    %7 = vector.broadcast %cst_5 : f32 to vector<8x128xf32>
    %8 = arith.maximumf %6, %7 : vector<8x128xf32>
    %9 = arith.truncf %8 : vector<8x128xf32> to vector<8x128xbf16>
    %c0_6 = arith.constant 0 : index
    %c0_7 = arith.constant 0 : index
    %10 = vector.load %arg4[%c0_6, %c0_7] : memref<128x128xbf16, #tpu.memory_space<vmem>>, vector<128x128xbf16>
    %cst_8 = arith.constant dense<0.000000e+00> : vector<8x128xf32>
    %11 = tpu.matmul %9, %10, %cst_8 {dimension_numbers = #tpu.dot_dimension_numbers<[1], [0], [0], [1], [0, 0, 1, 1], [], []>} : vector<8x128xbf16>, vector<128x128xbf16>, vector<8x128xf32> -> vector<8x128xf32>
    %c0_9 = arith.constant 0 : index
    %c0_10 = arith.constant 0 : index
    %12 = vector.load %arg5[%c0_9, %c0_10] : memref<1x128xf32, #tpu.memory_space<vmem>>, vector<1x128xf32>
    %13 = vector.broadcast %12 : vector<1x128xf32> to vector<8x128xf32>
    %14 = arith.addf %11, %13 : vector<8x128xf32>
    %cst_11 = arith.constant 0.000000e+00 : f32
    %15 = vector.broadcast %cst_11 : f32 to vector<8x128xf32>
    %16 = arith.maximumf %14, %15 : vector<8x128xf32>
    %17 = arith.truncf %16 : vector<8x128xf32> to vector<8x128xbf16>
    %c0_12 = arith.constant 0 : index
    %c0_13 = arith.constant 0 : index
    %18 = vector.load %arg6[%c0_12, %c0_13] : memref<128x128xbf16, #tpu.memory_space<vmem>>, vector<128x128xbf16>
    %cst_14 = arith.constant dense<0.000000e+00> : vector<8x128xf32>
    %19 = tpu.matmul %17, %18, %cst_14 {dimension_numbers = #tpu.dot_dimension_numbers<[1], [0], [0], [1], [0, 0, 1, 1], [], []>} : vector<8x128xbf16>, vector<128x128xbf16>, vector<8x128xf32> -> vector<8x128xf32>
    %c0_15 = arith.constant 0 : index
    %c0_16 = arith.constant 0 : index
    %20 = vector.load %arg7[%c0_15, %c0_16] : memref<1x128xf32, #tpu.memory_space<vmem>>, vector<1x128xf32>
    %21 = vector.broadcast %20 : vector<1x128xf32> to vector<8x128xf32>
    %22 = arith.addf %19, %21 : vector<8x128xf32>
    %cst_17 = arith.constant 0.000000e+00 : f32
    %23 = vector.broadcast %cst_17 : f32 to vector<8x128xf32>
    %24 = arith.maximumf %22, %23 : vector<8x128xf32>
    %c0_18 = arith.constant 0 : index
    %c0_19 = arith.constant 0 : index
    %25 = vector.load %arg8[%c0_18, %c0_19] : memref<1x128xbf16, #tpu.memory_space<vmem>>, vector<1x128xbf16>
    %26 = arith.truncf %24 : vector<8x128xf32> to vector<8x128xbf16>
    %cst_20 = arith.constant dense<0.000000e+00> : vector<1x8xf32>
    %27 = tpu.matmul %25, %26, %cst_20 {dimension_numbers = #tpu.dot_dimension_numbers<[1], [1], [0], [0], [0, 0, 1, 0], [], []>} : vector<1x128xbf16>, vector<8x128xbf16>, vector<1x8xf32> -> vector<1x8xf32>
    %c0_21 = arith.constant 0 : index
    %c0_22 = arith.constant 0 : index
    %28 = vector.load %arg9[%c0_21, %c0_22] : memref<1x1xf32, #tpu.memory_space<vmem>>, vector<1x1xf32>
    %29 = vector.broadcast %28 : vector<1x1xf32> to vector<1x8xf32>
    %30 = arith.addf %27, %29 : vector<1x8xf32>
    %c0_23 = arith.constant 0 : index
    %c0_24 = arith.constant 0 : index
    %31 = vector.load %arg10[%c0_23, %c0_24] : memref<1x8xf32, #tpu.memory_space<vmem>>, vector<1x8xf32>
    tpu.vector_store %arg10[%c0_23, %c0_24], %30 {strides = array<i32>} : memref<1x8xf32, #tpu.memory_space<vmem>>, vector<1x8xf32>,
    return
  }
  func.func @transform_0(%arg0: i32) -> (i32, i32) {
    %c0_i32 = arith.constant 0 : i32
    %c0_i32_0 = arith.constant 0 : i32
    return %arg0, %c0_i32 : i32, i32
  }
  func.func @transform_1(%arg0: i32) -> (i32, i32) {
    %c0_i32 = arith.constant 0 : i32
    %c0_i32_0 = arith.constant 0 : i32
    %c0_i32_1 = arith.constant 0 : i32
    return %c0_i32, %c0_i32_0 : i32, i32
  }
  func.func @transform_2(%arg0: i32) -> (i32, i32) {
    %c0_i32 = arith.constant 0 : i32
    %c0_i32_0 = arith.constant 0 : i32
    %c0_i32_1 = arith.constant 0 : i32
    return %c0_i32, %c0_i32_0 : i32, i32
  }
  func.func @transform_3(%arg0: i32) -> (i32, i32) {
    %c0_i32 = arith.constant 0 : i32
    %c0_i32_0 = arith.constant 0 : i32
    %c0_i32_1 = arith.constant 0 : i32
    return %c0_i32, %c0_i32_0 : i32, i32
  }
  func.func @transform_4(%arg0: i32) -> (i32, i32) {
    %c0_i32 = arith.constant 0 : i32
    %c0_i32_0 = arith.constant 0 : i32
    %c0_i32_1 = arith.constant 0 : i32
    return %c0_i32, %c0_i32_0 : i32, i32
  }
  func.func @transform_5(%arg0: i32) -> (i32, i32) {
    %c0_i32 = arith.constant 0 : i32
    %c0_i32_0 = arith.constant 0 : i32
    %c0_i32_1 = arith.constant 0 : i32
    return %c0_i32, %c0_i32_0 : i32, i32
  }
  func.func @transform_6(%arg0: i32) -> (i32, i32) {
    %c0_i32 = arith.constant 0 : i32
    %c0_i32_0 = arith.constant 0 : i32
    %c0_i32_1 = arith.constant 0 : i32
    return %c0_i32, %c0_i32_0 : i32, i32
  }
  func.func @transform_7(%arg0: i32) -> (i32, i32) {
    %c0_i32 = arith.constant 0 : i32
    %c0_i32_0 = arith.constant 0 : i32
    %c0_i32_1 = arith.constant 0 : i32
    return %c0_i32, %c0_i32_0 : i32, i32
  }
  func.func @transform_8(%arg0: i32) -> (i32, i32) {
    %c0_i32 = arith.constant 0 : i32
    %c0_i32_0 = arith.constant 0 : i32
    %c0_i32_1 = arith.constant 0 : i32
    return %c0_i32, %c0_i32_0 : i32, i32
  }
  func.func @transform_9(%arg0: i32) -> (i32, i32) {
    %c0_i32 = arith.constant 0 : i32
    %c0_i32_0 = arith.constant 0 : i32
    return %c0_i32, %arg0 : i32, i32
  }
}

</mosaic_0001>

<llo_original>
// kernel: tpu_custom_call.1
$region0: #{tpu_custom_call.1}
  #allocation0 [shape = 'u32[]', space=smem, size = 0x4, offset = 0x4, fixed_abs, tag = 'smem constant byte address 0x4 - core index']
  #allocation1 [shape = 'u32[72,128]{1,0:T(1,128)}', space=vmem, size = 0x9000, scoped, tag = 'internal scratch']
  #allocation2 [shape = 'f32[1,1]{1,0:T(1,128)S(1)}', space=vmem, size = 0x200, scoped, tag = 'scoped memory for tpu_custom_call.1']
  %s0 = inlined_call_operand.hbm [shape: f32[8,32], index: 0, kind: input, shape index: {}]
  %s1 = inlined_call_operand.hbm [shape: bf16[32,128], index: 1, kind: input, shape index: {}]
  %s2 = inlined_call_operand.vmem [shape: f32[1,128], index: 2, kind: input, shape index: {}]
  %s3 = inlined_call_operand.hbm [shape: bf16[128,128], index: 3, kind: input, shape index: {}]
  %s4 = inlined_call_operand.vmem [shape: f32[1,128], index: 4, kind: input, shape index: {}]
  %s5 = inlined_call_operand.hbm [shape: bf16[128,128], index: 5, kind: input, shape index: {}]
  %s6 = inlined_call_operand.vmem [shape: f32[1,128], index: 6, kind: input, shape index: {}]
  %s7 = inlined_call_operand.vmem [shape: bf16[1,128], index: 7, kind: input, shape index: {}]
  %s8 = inlined_call_operand.<no memory space> [shape: f32[1,1], index: 8, kind: input, shape index: {}]
  %s9 = inlined_call_operand.hbm [shape: f32[1,8], index: 9, kind: output, shape index: {}]
  %s10 = sld [smem:[#allocation0]]
  $region62: #{tpu_custom_call.1} parent=0
    _
  %s12 = ssub.s32 1, %s10
  %s13 = scalar_select 0, %s12, %s10
  %v14 = vstv %s8
  %15 = vst [vmem:[#allocation2] sm:$0x1] %v14
  $region1: #{tpu_custom_call.1} parent=0
    #allocation3 [shape = 'u8[4096]{0}', space=vmem, size = 0x1000, scoped, tag = 'input window, operand 0, single buffered']
    #allocation4 [shape = 's32[1]{0}', space=sflag, size = 0x4, scoped, tag = 'scoped memory for tpu_custom_call.1']
    #allocation5 [shape = 's32[1]{0}', space=sflag, size = 0x4, scoped, tag = 'scoped memory for tpu_custom_call.1']
    #allocation6 [shape = 'u8[8192]{0}', space=vmem, size = 0x2000, scoped, tag = 'input window, operand 1, single buffered']
    #allocation7 [shape = 's32[1]{0}', space=sflag, size = 0x4, scoped, tag = 'scoped memory for tpu_custom_call.1']
    #allocation8 [shape = 'u8[32768]{0}', space=vmem, size = 0x8000, scoped, tag = 'input window, operand 3, single buffered']
    #allocation9 [shape = 'u8[32768]{0}', space=vmem, size = 0x8000, scoped, tag = 'input window, operand 5, single buffered']
    #allocation10 [shape = 's32[1]{0}', space=sflag, size = 0x4, scoped, tag = 'scoped memory for tpu_custom_call.1']
    #allocation11 [shape = 'u8[512]{0}', space=vmem, size = 0x400, scoped, tag = 'output window, operand 0, single buffered']
    %16 = vsyncpa [#allocation4], 0
    %17 = vsyncpa [#allocation7], 0
    %18 = vsyncpa [#allocation10], 0
    %19 = vsyncpa [#allocation5], 0
    // Predicated region
    $region2: #{tpu_custom_call.1} parent=1 // pred_check
      _
    $region3: #{tpu_custom_call.1} parent=1 // pred_check_branch
      %21 = sbr.rel (0) target = $region5
    $region4: #{tpu_custom_call.1} parent=1 // pred_region
      %23 = vsyncadd [#allocation4], 0
      %s25 = sshll.u32 %s0, 4
      %s26 = int_to_ptr.hbm [resolvable:$true] %s25
      %s27 = sshll.u32 [#allocation3], 4
      %s28 = int_to_ptr.vmem [resolvable:$true] %s27
      %30 = dma.hbm_to_vmem [thread:$0]  %s26, 128, %s28, [#allocation4]
    $region5: #{tpu_custom_call.1} parent=1 // pred_fallthru
      _
    // Predicated region
    $region6: #{tpu_custom_call.1} parent=1 // pred_check
      _
    $region7: #{tpu_custom_call.1} parent=1 // pred_check_branch
      %32 = sbr.rel (0) target = $region9
    $region8: #{tpu_custom_call.1} parent=1 // pred_region
      %34 = vsyncadd [#allocation7], 0
      %s35 = sshll.u32 %s1, 4
      %s36 = int_to_ptr.hbm [resolvable:$true] %s35
      %s37 = sshll.u32 [#allocation6], 4
      %s38 = int_to_ptr.vmem [resolvable:$true] %s37
      %43 = dma.hbm_to_vmem [thread:$0]  %s36, 256, %s38, [#allocation7], 64, 64, 4
    $region9: #{tpu_custom_call.1} parent=1 // pred_fallthru
      _
    // Predicated region
    $region10: #{tpu_custom_call.1} parent=1 // pred_check
      _
    $region11: #{tpu_custom_call.1} parent=1 // pred_check_branch
      %45 = sbr.rel (0) target = $region13
    $region12: #{tpu_custom_call.1} parent=1 // pred_region
      _
    $region13: #{tpu_custom_call.1} parent=1 // pred_fallthru
      _
    // Predicated region
    $region14: #{tpu_custom_call.1} parent=1 // pred_check
      _
    $region15: #{tpu_custom_call.1} parent=1 // pred_check_branch
      %47 = sbr.rel (0) target = $region17
    $region16: #{tpu_custom_call.1} parent=1 // pred_region
      %49 = vsyncadd [#allocation7], 0
      %s50 = sshll.u32 %s3, 4
      %s51 = int_to_ptr.hbm [resolvable:$true] %s50
      %s52 = sshll.u32 [#allocation8], 4
      %s53 = int_to_ptr.vmem [resolvable:$true] %s52
      %58 = dma.hbm_to_vmem [thread:$0]  %s51, 1024, %s53, [#allocation7], 64, 64, 4
    $region17: #{tpu_custom_call.1} parent=1 // pred_fallthru
      _
    // Predicated region
    $region18: #{tpu_custom_call.1} parent=1 // pred_check
      _
    $region19: #{tpu_custom_call.1} parent=1 // pred_check_branch
      %60 = sbr.rel (0) target = $region21
    $region20: #{tpu_custom_call.1} parent=1 // pred_region
      _
    $region21: #{tpu_custom_call.1} parent=1 // pred_fallthru
      _
    // Predicated region
    $region22: #{tpu_custom_call.1} parent=1 // pred_check
      _
    $region23: #{tpu_custom_call.1} parent=1 // pred_check_branch
      %62 = sbr.rel (0) target = $region25
    $region24: #{tpu_custom_call.1} parent=1 // pred_region
      %64 = vsyncadd [#allocation10], 0
      %s65 = sshll.u32 %s5, 4
      %s66 = int_to_ptr.hbm [resolvable:$true] %s65
      %s67 = sshll.u32 [#allocation9], 4
      %s68 = int_to_ptr.vmem [resolvable:$true] %s67
      %73 = dma.hbm_to_vmem [thread:$0]  %s66, 1024, %s68, [#allocation10], 64, 64, 4
    $region25: #{tpu_custom_call.1} parent=1 // pred_fallthru
      _
    // Predicated region
    $region26: #{tpu_custom_call.1} parent=1 // pred_check
      _
    $region27: #{tpu_custom_call.1} parent=1 // pred_check_branch
      %75 = sbr.rel (0) target = $region29
    $region28: #{tpu_custom_call.1} parent=1 // pred_region
      _
    $region29: #{tpu_custom_call.1} parent=1 // pred_fallthru
      _
    // Predicated region
    $region30: #{tpu_custom_call.1} parent=1 // pred_check
      _
    $region31: #{tpu_custom_call.1} parent=1 // pred_check_branch
      %77 = sbr.rel (0) target = $region33
    $region32: #{tpu_custom_call.1} parent=1 // pred_region
      _
    $region33: #{tpu_custom_call.1} parent=1 // pred_fallthru
      _
    // Predicated region
    $region34: #{tpu_custom_call.1} parent=1 // pred_check
      _
    $region35: #{tpu_custom_call.1} parent=1 // pred_check_branch
      %79 = sbr.rel (0) target = $region37
    $region36: #{tpu_custom_call.1} parent=1 // pred_region
      _
    $region37: #{tpu_custom_call.1} parent=1 // pred_fallthru
      _
    // Predicated region
    $region38: #{tpu_custom_call.1} parent=1 // pred_check
      _
    $region39: #{tpu_custom_call.1} parent=1 // pred_check_branch
      %81 = sbr.rel (0) target = $region41
    $region40: #{tpu_custom_call.1} parent=1 // pred_region
      %83 = dma.done [#allocation4], 128
    $region41: #{tpu_custom_call.1} parent=1 // pred_fallthru
      _
    // Predicated region
    $region42: #{tpu_custom_call.1} parent=1 // pred_check
      _
    $region43: #{tpu_custom_call.1} parent=1 // pred_check_branch
      %85 = sbr.rel (0) target = $region45
    $region44: #{tpu_custom_call.1} parent=1 // pred_region
      %87 = dma.done [#allocation7], 256
    $region45: #{tpu_custom_call.1} parent=1 // pred_fallthru
      _
    // Predicated region
    $region46: #{tpu_custom_call.1} parent=1 // pred_check
      _
    $region47: #{tpu_custom_call.1} parent=1 // pred_check_branch
      %89 = sbr.rel (0) target = $region49
    $region48: #{tpu_custom_call.1} parent=1 // pred_region
      %91 = dma.done [#allocation7], 1024
    $region49: #{tpu_custom_call.1} parent=1 // pred_fallthru
      _
    // Predicated region
    $region50: #{tpu_custom_call.1} parent=1 // pred_check
      _
    $region51: #{tpu_custom_call.1} parent=1 // pred_check_branch
      %93 = sbr.rel (0) target = $region53
    $region52: #{tpu_custom_call.1} parent=1 // pred_region
      %95 = dma.done [#allocation10], 1024
    $region53: #{tpu_custom_call.1} parent=1 // pred_fallthru
      _
    %v97 = vld [vmem:[#allocation3] sm:$0xff]
    %v98 = vpack.c.bf16 %v97, %v97
    %v99 = vld [vmem:[#allocation6] sm:$0xf]
    %v100 = vld [vmem:[#allocation6 + $0x4] sm:$0xf]
    %v101 = vld [vmem:[#allocation6 + $0x8] sm:$0xf]
    %v102 = vld [vmem:[#allocation6 + $0xc] sm:$0xf]
    %v103 = vld [vmem:[%s2] sm:$0x1]
    %v105 = vperm.slane %v103, 0
    %v111 = vunpack.c.l.b16 %v99
    %v112 = vunpack.c.l.b16 %v100
    %v113 = vunpack.c.l.b16 %v101
    %v114 = vunpack.c.l.b16 %v102
    %v115 = vpack.c.b16 %v112, %v111
    %v116 = vpack.c.b16 %v114, %v113
    %vm119 = vcmask 261120
    %v121 = vsel %vm119, %v98, 0
    %123 = vmatpush.bf16.msra.mxu0 0
    %124 = vmatpush.bf16.msra.mxu0 0
    %125 = vmatpush.bf16.msra.mxu0 0
    %126 = vmatpush.bf16.msra.mxu0 0
    %127 = vmatpush.bf16.msra.mxu0 0
    %128 = vmatpush.bf16.msra.mxu0 0
    %129 = vmatpush.bf16.msra.mxu0 %v116
    %130 = vmatpush.bf16.msra.mxu0 %v115
    %131 = vmatmul.bf16.gmra.mxu0 %v121
    %v132 = vpop.f32.mrf.mxu0
    %v133 = vadd.f32 %v105, %v132
    %v134 = vpop.f32.mrf.mxu0
    %135 = vdwg.mxu0
    %v136 = vmax.f32 %v133, 0.0
    %v137 = vpack.c.bf16 %v136, %v136
    %v138 = vld [vmem:[#allocation8] sm:$0xf]
    %v139 = vld [vmem:[#allocation8 + $0x4] sm:$0xf]
    %v140 = vld [vmem:[#allocation8 + $0x8] sm:$0xf]
    %v141 = vld [vmem:[#allocation8 + $0xc] sm:$0xf]
    %v142 = vld [vmem:[#allocation8 + $0x10] sm:$0xf]
    %v143 = vld [vmem:[#allocation8 + $0x14] sm:$0xf]
    %v144 = vld [vmem:[#allocation8 + $0x18] sm:$0xf]
    %v145 = vld [vmem:[#allocation8 + $0x1c] sm:$0xf]
    %v146 = vld [vmem:[#allocation8 + $0x20] sm:$0xf]
    %v147 = vld [vmem:[#allocation8 + $0x24] sm:$0xf]
    %v148 = vld [vmem:[#allocation8 + $0x28] sm:$0xf]
    %v149 = vld [vmem:[#allocation8 + $0x2c] sm:$0xf]
    %v150 = vld [vmem:[#allocation8 + $0x30] sm:$0xf]
    %v151 = vld [vmem:[#allocation8 + $0x34] sm:$0xf]
    %v152 = vld [vmem:[#allocation8 + $0x38] sm:$0xf]
    %v153 = vld [vmem:[#allocation8 + $0x3c] sm:$0xf]
    %v154 = vld [vmem:[%s4] sm:$0x1]
    %v156 = vperm.slane %v154, 0
    %v174 = vunpack.c.l.b16 %v138
    %v175 = vunpack.c.l.b16 %v139
    %v176 = vunpack.c.l.b16 %v140
    %v177 = vunpack.c.l.b16 %v141
    %v178 = vunpack.c.l.b16 %v142
    %v179 = vunpack.c.l.b16 %v143
    %v180 = vunpack.c.l.b16 %v144
    %v181 = vunpack.c.l.b16 %v145
    %v182 = vunpack.c.l.b16 %v146
    %v183 = vunpack.c.l.b16 %v147
    %v184 = vunpack.c.l.b16 %v148
    %v185 = vunpack.c.l.b16 %v149
    %v186 = vunpack.c.l.b16 %v150
    %v187 = vunpack.c.l.b16 %v151
    %v188 = vunpack.c.l.b16 %v152
    %v189 = vunpack.c.l.b16 %v153
    %v190 = vpack.c.b16 %v175, %v174
    %v191 = vpack.c.b16 %v177, %v176
    %v192 = vpack.c.b16 %v179, %v178
    %v193 = vpack.c.b16 %v181, %v180
    %v194 = vpack.c.b16 %v183, %v182
    %v195 = vpack.c.b16 %v185, %v184
    %v196 = vpack.c.b16 %v187, %v186
    %v197 = vpack.c.b16 %v189, %v188
    %206 = vmatpush.bf16.msra.mxu0 %v197
    %207 = vmatpush.bf16.msra.mxu0 %v196
    %208 = vmatpush.bf16.msra.mxu0 %v195
    %209 = vmatpush.bf16.msra.mxu0 %v194
    %210 = vmatpush.bf16.msra.mxu0 %v193
    %211 = vmatpush.bf16.msra.mxu0 %v192
    %212 = vmatpush.bf16.msra.mxu0 %v191
    %213 = vmatpush.bf16.msra.mxu0 %v190
    %214 = vmatmul.bf16.gmra.mxu0 %v137
    %v215 = vpop.f32.mrf.mxu0
    %v216 = vadd.f32 %v156, %v215
    %v217 = vpop.f32.mrf.mxu0
    %218 = vdwg.mxu0
    %v219 = vmax.f32 %v216, 0.0
    %v220 = vpack.c.bf16 %v219, %v219
    %v221 = vld [vmem:[#allocation9] sm:$0xf]
    %v222 = vld [vmem:[#allocation9 + $0x4] sm:$0xf]
    %v223 = vld [vmem:[#allocation9 + $0x8] sm:$0xf]
    %v224 = vld [vmem:[#allocation9 + $0xc] sm:$0xf]
    %v225 = vld [vmem:[#allocation9 + $0x10] sm:$0xf]
    %v226 = vld [vmem:[#allocation9 + $0x14] sm:$0xf]
    %v227 = vld [vmem:[#allocation9 + $0x18] sm:$0xf]
    %v228 = vld [vmem:[#allocation9 + $0x1c] sm:$0xf]
    %v229 = vld [vmem:[#allocation9 + $0x20] sm:$0xf]
    %v230 = vld [vmem:[#allocation9 + $0x24] sm:$0xf]
    %v231 = vld [vmem:[#allocation9 + $0x28] sm:$0xf]
    %v232 = vld [vmem:[#allocation9 + $0x2c] sm:$0xf]
    %v233 = vld [vmem:[#allocation9 + $0x30] sm:$0xf]
    %v234 = vld [vmem:[#allocation9 + $0x34] sm:$0xf]
    %v235 = vld [vmem:[#allocation9 + $0x38] sm:$0xf]
    %v236 = vld [vmem:[#allocation9 + $0x3c] sm:$0xf]
    %v237 = vld [vmem:[%s6] sm:$0x1]
    %v239 = vperm.slane %v237, 0
    %v257 = vunpack.c.l.b16 %v221
    %v258 = vunpack.c.l.b16 %v222
    %v259 = vunpack.c.l.b16 %v223
    %v260 = vunpack.c.l.b16 %v224
    %v261 = vunpack.c.l.b16 %v225
    %v262 = vunpack.c.l.b16 %v226
    %v263 = vunpack.c.l.b16 %v227
    %v264 = vunpack.c.l.b16 %v228
    %v265 = vunpack.c.l.b16 %v229
    %v266 = vunpack.c.l.b16 %v230
    %v267 = vunpack.c.l.b16 %v231
    %v268 = vunpack.c.l.b16 %v232
    %v269 = vunpack.c.l.b16 %v233
    %v270 = vunpack.c.l.b16 %v234
    %v271 = vunpack.c.l.b16 %v235
    %v272 = vunpack.c.l.b16 %v236
    %v273 = vpack.c.b16 %v258, %v257
    %v274 = vpack.c.b16 %v260, %v259
    %v275 = vpack.c.b16 %v262, %v261
    %v276 = vpack.c.b16 %v264, %v263
    %v277 = vpack.c.b16 %v266, %v265
    %v278 = vpack.c.b16 %v268, %v267
    %v279 = vpack.c.b16 %v270, %v269
    %v280 = vpack.c.b16 %v272, %v271
    %289 = vmatpush.bf16.msra.mxu0 %v280
    %290 = vmatpush.bf16.msra.mxu0 %v279
    %291 = vmatpush.bf16.msra.mxu0 %v278
    %292 = vmatpush.bf16.msra.mxu0 %v277
    %293 = vmatpush.bf16.msra.mxu0 %v276
    %294 = vmatpush.bf16.msra.mxu0 %v275
    %295 = vmatpush.bf16.msra.mxu0 %v274
    %296 = vmatpush.bf16.msra.mxu0 %v273
    %297 = vmatmul.bf16.gmra.mxu0 %v220
    %v298 = vpop.f32.mrf.mxu0
    %v299 = vadd.f32 %v239, %v298
    %v300 = vpop.f32.mrf.mxu0
    %301 = vdwg.mxu0
    %v302 = vmax.f32 %v299, 0.0
    %v303 = vld [vmem:[%s7] sm:$0x1]
    %v304 = vpack.c.bf16 %v302, %v302
    %v305 = vld [vmem:[#allocation2] sm:$0x1]
    %307 = vset.pattern.permute.xlu0 0
    %308 = vperm.xlu0 %307, %v305
    %v309 = vpop.permute.xlu0 %308
    %v311 = vperm.slane %v309, 0
    %312 = vmatpush.bf16.xpose.msra.mxu0 0
    %313 = vmatpush.bf16.xpose.msra.mxu0 0
    %314 = vmatpush.bf16.xpose.msra.mxu0 0
    %315 = vmatpush.bf16.xpose.msra.mxu0 0
    %316 = vmatpush.bf16.xpose.msra.mxu0 0
    %317 = vmatpush.bf16.xpose.msra.mxu0 0
    %318 = vmatpush.bf16.xpose.msra.mxu0 0
    %319 = vmatpush.bf16.xpose.msra.mxu0 %v304
    %320 = vmatmul.bf16.gmra.mxu0 %v303
    %v321 = vpop.f32.mrf.mxu0
    %v322 = vadd.f32 %v311, %v321
    %v323 = vpop.f32.mrf.mxu0
    %324 = vdwg.mxu0
    %vm325 = vcmask 57344
    %326 = vst.msk [vmem:[#allocation11] sm:$0x1] %vm325, %v322
    // Predicated region
    $region54: #{tpu_custom_call.1} parent=1 // pred_check
      _
    $region55: #{tpu_custom_call.1} parent=1 // pred_check_branch
      %328 = sbr.rel (0) target = $region57
    $region56: #{tpu_custom_call.1} parent=1 // pred_region
      %330 = vsyncadd [#allocation5], 0
      %s332 = sshll.u32 [#allocation11], 4
      %s333 = int_to_ptr.vmem [resolvable:$true] %s332
      %s334 = sshll.u32 %s9, 4
      %s335 = int_to_ptr.hbm [resolvable:$true] %s334
      %337 = dma.vmem_to_hbm [thread:$0]  %s333, 16, %s335, [#allocation5]
    $region57: #{tpu_custom_call.1} parent=1 // pred_fallthru
      _
    // Predicated region
    $region58: #{tpu_custom_call.1} parent=1 // pred_check
      _
    $region59: #{tpu_custom_call.1} parent=1 // pred_check_branch
      %339 = sbr.rel (0) target = $region61
    $region60: #{tpu_custom_call.1} parent=1 // pred_region
      %341 = dma.done [#allocation5], 16
    $region61: #{tpu_custom_call.1} parent=1 // pred_fallthru
      _
    %342 = vsyncpa [#allocation4], 1
    %343 = vsyncpa [#allocation7], 1
    %344 = vsyncpa [#allocation10], 1
    %345 = vsyncpa [#allocation5], 1

</llo_original>
